<compile_context>
chip_gen: v5e
topology: v5e:2x2
jax: 0.10.0
libtpu: 0.0.40
codegen_flags: <defaults>
</compile_context>

<pallas_src>
import math
import jax
import jax.numpy as jnp
from jax.experimental import pallas as pl
from jax.experimental.pallas import tpu as pltpu

# ---------------- config (small, consistent with the module) ----------------
B = 2          # batch
N = 8          # sequence length (token 0 = CLS)
C = 32         # embedding dim
NUM_HEADS = 4
HEAD_DIM = C // NUM_HEADS
MLP_RATIO = 4.0
HIDDEN = int(C * MLP_RATIO)
SCALE = HEAD_DIM ** (-0.5)
EPS = 1e-5     # nn.LayerNorm default

# column offsets inside the fused weight slab (C, 5C + HIDDEN)
_QKV0, _QKV1 = 0, 3 * C                       # wq*scale | wk | wv
_WO0, _WO1 = 3 * C, 4 * C                     # attention output projection
_W10, _W11 = 4 * C, 4 * C + HIDDEN            # mlp fc1
_HB0, _HB1 = 4 * C + HIDDEN, 5 * C + HIDDEN   # block-diagonal head-sum mask
W_SLAB_COLS = 5 * C + HIDDEN

# row indices inside the packed bias/affine slab (8, 128)
_G1, _B1, _BO, _G2, _B2, _BB2, _BB1 = 0, 1, 2, 3, 4, 5, 6


def cross_attention_block_kernel(
    x_ref,       # (B, N, C)
    w_ref,       # (C, 5C+HIDDEN)  fused [wq*scale | wk | wv | wo | w1 | head_blk]
    w2_ref,      # (HIDDEN, C)     mlp fc2
    vec_ref,     # (8, 128)        packed biases / affine vectors
    o_ref,       # (1, B*C)        lane-contiguous CLS output row
):
    x = x_ref[...]                                               # (B, N, C)

    # packed affine/bias vectors (static VMEM ref views, no extra DMAs)
    g1 = vec_ref[_G1:_G1 + 1, 0:C]
    b1 = vec_ref[_B1:_B1 + 1, 0:C]
    bo = vec_ref[_BO:_BO + 1, 0:C]
    g2 = vec_ref[_G2:_G2 + 1, 0:C]
    b2 = vec_ref[_B2:_B2 + 1, 0:C]
    bb2 = vec_ref[_BB2:_BB2 + 1, 0:C]
    bb1 = vec_ref[_BB1:_BB1 + 1, 0:HIDDEN]

    # ---- LayerNorm1 over channels, all (batch, token) rows at once ----
    mu = jnp.mean(x, axis=-1, keepdims=True)
    var = jnp.mean((x - mu) ** 2, axis=-1, keepdims=True)
    ln1 = (x - mu) * jax.lax.rsqrt(var + EPS) * g1 + b1          # (B, N, C)

    # ---- fused QKV projection: one MXU call; SCALE already folded into wq ----
    qkv = jnp.dot(ln1.reshape(B * N, C), w_ref[:, _QKV0:_QKV1],
                  preferred_element_type=jnp.float32)            # (B*N, 3C)
    q = qkv[:, 0:C].reshape(B, N, C)[:, 0:1, :]                  # (B, 1, C) CLS query
    k = qkv[:, C:2 * C].reshape(B, N, C)                         # (B, N, C)
    v = qkv[:, 2 * C:3 * C].reshape(B, N, C)                     # (B, N, C)

    # ---- per-head scores: sum q*k within each head via ONE block-diagonal
    #      matmul (precomputed mask); result is lane-replicated per head ----
    qk = q * k                                                   # (B, N, C)  (VPU)
    s = jnp.dot(qk.reshape(B * N, C), w_ref[:, _HB0:_HB1],
                preferred_element_type=jnp.float32).reshape(B, N, C)

    # ---- softmax over tokens (axis=1), per lane; EUP approx reciprocal ----
    s = s - jnp.max(s, axis=1, keepdims=True)
    p = jnp.exp(s)
    p = p * pl.reciprocal(jnp.sum(p, axis=1, keepdims=True), approx=True)

    # ---- weighted sum of V (VPU) gives the concatenated heads directly ----
    attn_out = jnp.sum(p * v, axis=1)                            # (B, C)
    proj = jnp.dot(attn_out, w_ref[:, _WO0:_WO1],
                   preferred_element_type=jnp.float32) + bo      # (B, C)

    # ---- residual: CLS token of the ORIGINAL input + attention output ----
    x_cls = x[:, 0, :] + proj                                    # (B, C)

    # ---- LayerNorm2 + MLP (exact erf GELU, matches nn.GELU) + residual ----
    mu2 = jnp.mean(x_cls, axis=-1, keepdims=True)
    var2 = jnp.mean((x_cls - mu2) ** 2, axis=-1, keepdims=True)
    ln2 = (x_cls - mu2) * jax.lax.rsqrt(var2 + EPS) * g2 + b2

    h = jnp.dot(ln2, w_ref[:, _W10:_W11],
                preferred_element_type=jnp.float32) + bb1        # (B, HIDDEN)
    h = 0.5 * h * (1.0 + jax.lax.erf(h * (1.0 / math.sqrt(2.0))))
    h = jnp.dot(h, w2_ref[...],
                preferred_element_type=jnp.float32) + bb2        # (B, C)

    res = (x_cls + h).astype(o_ref.dtype)                        # (B, C)
    # single lane-contiguous row: [batch0 | batch1 | ...] along lanes
    o_ref[...] = jnp.concatenate([res[i:i + 1, :] for i in range(B)], axis=1)


def pack_params(params):
    """One-time, off-hot-path packing: fuse wq|wk|wv (SCALE folded into wq),
    append wo / fc1 / block-diag head mask into one lane-dense weight slab,
    and pack the seven tiny bias/affine vectors into a single (8,128) slab."""
    (g1, b1, wq, wk, wv, wo, bo, g2, b2, w1, bb1, w2, bb2) = params
    head = jnp.arange(C, dtype=jnp.int32) // HEAD_DIM
    head_blk = (head[:, None] == head[None, :]).astype(jnp.float32)   # (C, C)
    w_slab = jnp.concatenate([wq * SCALE, wk, wv, wo, w1, head_blk], axis=1)
    assert w_slab.shape == (C, W_SLAB_COLS)

    vec = jnp.zeros((8, 128), jnp.float32)
    vec = vec.at[_G1, 0:C].set(g1[0])
    vec = vec.at[_B1, 0:C].set(b1[0])
    vec = vec.at[_BO, 0:C].set(bo[0])
    vec = vec.at[_G2, 0:C].set(g2[0])
    vec = vec.at[_B2, 0:C].set(b2[0])
    vec = vec.at[_BB2, 0:C].set(bb2[0])
    vec = vec.at[_BB1, 0:HIDDEN].set(bb1[0])
    return w_slab, w2, vec


@jax.jit
def cross_attention_block(x, w_slab, w2, vec):
    out_row = pl.pallas_call(
        cross_attention_block_kernel,
        out_shape=jax.ShapeDtypeStruct((1, B * C), x.dtype),
        grid=(1,),                                   # whole problem in VMEM
        in_specs=[
            pl.BlockSpec((B, N, C), lambda i: (0, 0, 0)),          # x
            pl.BlockSpec((C, W_SLAB_COLS), lambda i: (0, 0)),      # fused weights
            pl.BlockSpec((HIDDEN, C), lambda i: (0, 0)),           # w2
            pl.BlockSpec((8, 128), lambda i: (0, 0)),              # packed vectors
        ],
        out_specs=pl.BlockSpec((1, B * C), lambda i: (0, 0)),
        compiler_params=pltpu.CompilerParams(
            dimension_semantics=("arbitrary",),
        ),
    )(x, w_slab, w2, vec)
    return out_row.reshape(B, 1, C)                  # metadata-only reshape


# ---------------- pure-JAX reference for verification ----------------
def reference_forward(x, params):
    (g1, b1, wq, wk, wv, wo, bo, g2, b2, w1, bb1, w2, bb2) = params

    def ln(t, g, b):
        mu = t.mean(-1, keepdims=True)
        var = ((t - mu) ** 2).mean(-1, keepdims=True)
        return (t - mu) / jnp.sqrt(var + EPS) * g[0] + b[0]

    Bx, Nx, Cx = x.shape
    x1 = ln(x, g1, b1)
    q = x1[:, 0:1] @ wq
    k = x1 @ wk
    v = x1 @ wv
    qh = q.reshape(Bx, 1, NUM_HEADS, HEAD_DIM).transpose(0, 2, 1, 3)
    kh = k.reshape(Bx, Nx, NUM_HEADS, HEAD_DIM).transpose(0, 2, 1, 3)
    vh = v.reshape(Bx, Nx, NUM_HEADS, HEAD_DIM).transpose(0, 2, 1, 3)
    attn = (qh @ kh.transpose(0, 1, 3, 2)) * SCALE
    attn = jax.nn.softmax(attn, axis=-1)
    o = (attn @ vh).transpose(0, 2, 1, 3).reshape(Bx, 1, Cx)
    o = o @ wo + bo[0]
    x_cls = x[:, 0:1] + o
    x2 = ln(x_cls, g2, b2)
    h = jax.nn.gelu(x2 @ w1 + bb1[0], approximate=False)
    h = h @ w2 + bb2[0]
    return x_cls + h


def init_params(key):
    ks = jax.random.split(key, 8)
    f32 = jnp.float32
    g1 = jnp.ones((1, C), f32)
    b1 = jnp.zeros((1, C), f32)
    wq = jax.random.normal(ks[0], (C, C), f32) * 0.05
    wk = jax.random.normal(ks[1], (C, C), f32) * 0.05
    wv = jax.random.normal(ks[2], (C, C), f32) * 0.05
    wo = jax.random.normal(ks[3], (C, C), f32) * 0.05
    bo = jax.random.normal(ks[4], (1, C), f32) * 0.02
    g2 = jnp.ones((1, C), f32)
    b2 = jnp.zeros((1, C), f32)
    w1 = jax.random.normal(ks[5], (C, HIDDEN), f32) * 0.05
    bb1 = jnp.zeros((1, HIDDEN), f32)
    w2 = jax.random.normal(ks[6], (HIDDEN, C), f32) * 0.05
    bb2 = jnp.zeros((1, C), f32)
    return (g1, b1, wq, wk, wv, wo, bo, g2, b2, w1, bb1, w2, bb2)


if __name__ == "__main__":
    key = jax.random.PRNGKey(0)
    kx, kp = jax.random.split(key)
    x = jax.random.normal(kx, (B, N, C), jnp.float32)
    params = init_params(kp)
    packed = pack_params(params)          # once, off the per-call hot path

    out = cross_attention_block(x, *packed)
    out = jax.block_until_ready(out)

    ref = reference_forward(x, params)
    assert out.shape == (B, 1, C), out.shape
    # Tolerance covers the EUP approximate softmax reciprocal (intentional).
    max_err = float(jnp.max(jnp.abs(out - ref)))
    assert jnp.allclose(out, ref, atol=5e-4, rtol=5e-4), max_err

    print("KERNEL_OK")
</pallas_src>

<mosaic_0001>
module attributes {stable_mosaic.version = 11 : i64} {
  func.func @cross_attention_block_kernel(%arg0: i32, %arg1: memref<2x8x32xf32, #tpu.memory_space<vmem>>, %arg2: memref<32x288xf32, #tpu.memory_space<vmem>>, %arg3: memref<128x32xf32, #tpu.memory_space<vmem>>, %arg4: memref<8x128xf32, #tpu.memory_space<vmem>>, %arg5: memref<1x64xf32, #tpu.memory_space<vmem>>) attributes {dimension_semantics = [#tpu.dimension_semantics<arbitrary>], iteration_bounds = array<i64: 1>, scalar_prefetch = 0 : i64, scratch_operands = 0 : i64, tpu.core_type = #tpu.core_type<tc>, window_params = [{pipeline_mode = #tpu.pipeline_mode<synchronous>, transform_indices = @transform_0, window_bounds = array<i64: 2, 8, 32>}, {pipeline_mode = #tpu.pipeline_mode<synchronous>, transform_indices = @transform_1, window_bounds = array<i64: 32, 288>}, {pipeline_mode = #tpu.pipeline_mode<synchronous>, transform_indices = @transform_2, window_bounds = array<i64: 128, 32>}, {pipeline_mode = #tpu.pipeline_mode<synchronous>, transform_indices = @transform_3, window_bounds = array<i64: 8, 128>}, {pipeline_mode = #tpu.pipeline_mode<synchronous>, transform_indices = @transform_4, window_bounds = array<i64: 1, 64>}]} {
    %c0 = arith.constant 0 : index
    %c0_0 = arith.constant 0 : index
    %c0_1 = arith.constant 0 : index
    %0 = vector.load %arg1[%c0, %c0_0, %c0_1] : memref<2x8x32xf32, #tpu.memory_space<vmem>>, vector<2x8x32xf32>
    %c0_2 = arith.constant 0 : index
    %c0_3 = arith.constant 0 : index
    %1 = vector.load %arg4[%c0_2, %c0_3] : memref<8x128xf32, #tpu.memory_space<vmem>>, vector<1x32xf32>
    %c1 = arith.constant 1 : index
    %c0_4 = arith.constant 0 : index
    %2 = vector.load %arg4[%c1, %c0_4] : memref<8x128xf32, #tpu.memory_space<vmem>>, vector<1x32xf32>
    %c2 = arith.constant 2 : index
    %c0_5 = arith.constant 0 : index
    %3 = vector.load %arg4[%c2, %c0_5] : memref<8x128xf32, #tpu.memory_space<vmem>>, vector<1x32xf32>
    %c3 = arith.constant 3 : index
    %c0_6 = arith.constant 0 : index
    %4 = vector.load %arg4[%c3, %c0_6] : memref<8x128xf32, #tpu.memory_space<vmem>>, vector<1x32xf32>
    %c4 = arith.constant 4 : index
    %c0_7 = arith.constant 0 : index
    %5 = vector.load %arg4[%c4, %c0_7] : memref<8x128xf32, #tpu.memory_space<vmem>>, vector<1x32xf32>
    %c5 = arith.constant 5 : index
    %c0_8 = arith.constant 0 : index
    %6 = vector.load %arg4[%c5, %c0_8] : memref<8x128xf32, #tpu.memory_space<vmem>>, vector<1x32xf32>
    %c6 = arith.constant 6 : index
    %c0_9 = arith.constant 0 : index
    %7 = vector.load %arg4[%c6, %c0_9] : memref<8x128xf32, #tpu.memory_space<vmem>>, vector<1x128xf32>
    %cst = arith.constant dense<0.000000e+00> : vector<2x8xf32>
    %8 = vector.multi_reduction <add>, %0, %cst [2] : vector<2x8x32xf32> to vector<2x8xf32>
    %9 = vector.shape_cast %8 : vector<2x8xf32> to vector<2x8x1xf32>
    %cst_10 = arith.constant 3.200000e+01 : f32
    %10 = vector.broadcast %cst_10 : f32 to vector<2x8x1xf32>
    %11 = arith.divf %9, %10 : vector<2x8x1xf32>
    %12 = vector.broadcast %11 : vector<2x8x1xf32> to vector<2x8x32xf32>
    %13 = arith.subf %0, %12 : vector<2x8x32xf32>
    %14 = arith.mulf %13, %13 : vector<2x8x32xf32>
    %cst_11 = arith.constant dense<0.000000e+00> : vector<2x8xf32>
    %15 = vector.multi_reduction <add>, %14, %cst_11 [2] : vector<2x8x32xf32> to vector<2x8xf32>
    %16 = vector.shape_cast %15 : vector<2x8xf32> to vector<2x8x1xf32>
    %cst_12 = arith.constant 3.200000e+01 : f32
    %17 = vector.broadcast %cst_12 : f32 to vector<2x8x1xf32>
    %18 = arith.divf %16, %17 : vector<2x8x1xf32>
    %19 = vector.broadcast %11 : vector<2x8x1xf32> to vector<2x8x32xf32>
    %20 = arith.subf %0, %19 : vector<2x8x32xf32>
    %cst_13 = arith.constant 9.99999974E-6 : f32
    %21 = vector.broadcast %cst_13 : f32 to vector<2x8x1xf32>
    %22 = arith.addf %18, %21 : vector<2x8x1xf32>
    %23 = math.rsqrt %22 : vector<2x8x1xf32>
    %24 = vector.broadcast %23 : vector<2x8x1xf32> to vector<2x8x32xf32>
    %25 = arith.mulf %20, %24 : vector<2x8x32xf32>
    %26 = vector.shape_cast %1 : vector<1x32xf32> to vector<1x1x32xf32>
    %27 = vector.broadcast %26 : vector<1x1x32xf32> to vector<2x8x32xf32>
    %28 = arith.mulf %25, %27 : vector<2x8x32xf32>
    %29 = vector.shape_cast %2 : vector<1x32xf32> to vector<1x1x32xf32>
    %30 = vector.broadcast %29 : vector<1x1x32xf32> to vector<2x8x32xf32>
    %31 = arith.addf %28, %30 : vector<2x8x32xf32>
    %32 = vector.shape_cast %31 : vector<2x8x32xf32> to vector<16x32xf32>
    %c0_14 = arith.constant 0 : index
    %c0_15 = arith.constant 0 : index
    %33 = vector.load %arg2[%c0_14, %c0_15] : memref<32x288xf32, #tpu.memory_space<vmem>>, vector<32x96xf32>
    %cst_16 = arith.constant dense<0.000000e+00> : vector<16x96xf32>
    %34 = tpu.matmul %32, %33, %cst_16 {dimension_numbers = #tpu.dot_dimension_numbers<[1], [0], [0], [1], [0, 0, 1, 1], [], []>} : vector<16x32xf32>, vector<32x96xf32>, vector<16x96xf32> -> vector<16x96xf32>
    %35 = vector.extract_strided_slice %34 {offsets = [0, 0], sizes = [16, 32], strides = [1, 1]} : vector<16x96xf32> to vector<16x32xf32>
    %36 = vector.shape_cast %35 : vector<16x32xf32> to vector<2x8x32xf32>
    %37 = vector.extract_strided_slice %36 {offsets = [0, 0, 0], sizes = [2, 1, 32], strides = [1, 1, 1]} : vector<2x8x32xf32> to vector<2x1x32xf32>
    %38 = vector.extract_strided_slice %34 {offsets = [0, 32], sizes = [16, 32], strides = [1, 1]} : vector<16x96xf32> to vector<16x32xf32>
    %39 = vector.shape_cast %38 : vector<16x32xf32> to vector<2x8x32xf32>
    %40 = vector.extract_strided_slice %34 {offsets = [0, 64], sizes = [16, 32], strides = [1, 1]} : vector<16x96xf32> to vector<16x32xf32>
    %41 = vector.shape_cast %40 : vector<16x32xf32> to vector<2x8x32xf32>
    %42 = vector.broadcast %37 : vector<2x1x32xf32> to vector<2x8x32xf32>
    %43 = arith.mulf %42, %39 : vector<2x8x32xf32>
    %44 = vector.shape_cast %43 : vector<2x8x32xf32> to vector<16x32xf32>
    %c0_17 = arith.constant 0 : index
    %c256 = arith.constant 256 : index
    %45 = vector.load %arg2[%c0_17, %c256] : memref<32x288xf32, #tpu.memory_space<vmem>>, vector<32x32xf32>
    %cst_18 = arith.constant dense<0.000000e+00> : vector<16x32xf32>
    %46 = tpu.matmul %44, %45, %cst_18 {dimension_numbers = #tpu.dot_dimension_numbers<[1], [0], [0], [1], [0, 0, 1, 1], [], []>} : vector<16x32xf32>, vector<32x32xf32>, vector<16x32xf32> -> vector<16x32xf32>
    %47 = vector.shape_cast %46 : vector<16x32xf32> to vector<2x8x32xf32>
    %cst_19 = arith.constant dense<0xFF800000> : vector<2x32xf32>
    %48 = vector.multi_reduction <maximumf>, %47, %cst_19 [1] : vector<2x8x32xf32> to vector<2x32xf32>
    %49 = vector.shape_cast %48 : vector<2x32xf32> to vector<2x1x32xf32>
    %50 = vector.broadcast %49 : vector<2x1x32xf32> to vector<2x8x32xf32>
    %51 = arith.subf %47, %50 : vector<2x8x32xf32>
    %52 = math.exp %51 : vector<2x8x32xf32>
    %cst_20 = arith.constant dense<0.000000e+00> : vector<2x32xf32>
    %53 = vector.multi_reduction <add>, %52, %cst_20 [1] : vector<2x8x32xf32> to vector<2x32xf32>
    %54 = vector.shape_cast %53 : vector<2x32xf32> to vector<2x1x32xf32>
    %55 = tpu.reciprocal %54 {approx = true} : vector<2x1x32xf32> -> vector<2x1x32xf32>
    %56 = vector.broadcast %55 : vector<2x1x32xf32> to vector<2x8x32xf32>
    %57 = arith.mulf %52, %56 : vector<2x8x32xf32>
    %58 = arith.mulf %57, %41 : vector<2x8x32xf32>
    %cst_21 = arith.constant dense<0.000000e+00> : vector<2x32xf32>
    %59 = vector.multi_reduction <add>, %58, %cst_21 [1] : vector<2x8x32xf32> to vector<2x32xf32>
    %c0_22 = arith.constant 0 : index
    %c96 = arith.constant 96 : index
    %60 = vector.load %arg2[%c0_22, %c96] : memref<32x288xf32, #tpu.memory_space<vmem>>, vector<32x32xf32>
    %cst_23 = arith.constant dense<0.000000e+00> : vector<2x32xf32>
    %61 = tpu.matmul %59, %60, %cst_23 {dimension_numbers = #tpu.dot_dimension_numbers<[1], [0], [0], [1], [0, 0, 1, 1], [], []>} : vector<2x32xf32>, vector<32x32xf32>, vector<2x32xf32> -> vector<2x32xf32>
    %62 = vector.broadcast %3 : vector<1x32xf32> to vector<2x32xf32>
    %63 = arith.addf %61, %62 : vector<2x32xf32>
    %64 = vector.extract_strided_slice %0 {offsets = [0, 0, 0], sizes = [2, 1, 32], strides = [1, 1, 1]} : vector<2x8x32xf32> to vector<2x1x32xf32>
    %65 = vector.shape_cast %64 : vector<2x1x32xf32> to vector<2x32xf32>
    %66 = arith.addf %65, %63 : vector<2x32xf32>
    %cst_24 = arith.constant dense<0.000000e+00> : vector<2xf32>
    %67 = vector.multi_reduction <add>, %66, %cst_24 [1] : vector<2x32xf32> to vector<2xf32>
    %68 = vector.shape_cast %67 : vector<2xf32> to vector<2x1xf32>
    %cst_25 = arith.constant 3.200000e+01 : f32
    %69 = vector.broadcast %cst_25 : f32 to vector<2x1xf32>
    %70 = arith.divf %68, %69 : vector<2x1xf32>
    %71 = vector.broadcast %70 : vector<2x1xf32> to vector<2x32xf32>
    %72 = arith.subf %66, %71 : vector<2x32xf32>
    %73 = arith.mulf %72, %72 : vector<2x32xf32>
    %cst_26 = arith.constant dense<0.000000e+00> : vector<2xf32>
    %74 = vector.multi_reduction <add>, %73, %cst_26 [1] : vector<2x32xf32> to vector<2xf32>
    %75 = vector.shape_cast %74 : vector<2xf32> to vector<2x1xf32>
    %cst_27 = arith.constant 3.200000e+01 : f32
    %76 = vector.broadcast %cst_27 : f32 to vector<2x1xf32>
    %77 = arith.divf %75, %76 : vector<2x1xf32>
    %78 = vector.broadcast %70 : vector<2x1xf32> to vector<2x32xf32>
    %79 = arith.subf %66, %78 : vector<2x32xf32>
    %cst_28 = arith.constant 9.99999974E-6 : f32
    %80 = vector.broadcast %cst_28 : f32 to vector<2x1xf32>
    %81 = arith.addf %77, %80 : vector<2x1xf32>
    %82 = math.rsqrt %81 : vector<2x1xf32>
    %83 = vector.broadcast %82 : vector<2x1xf32> to vector<2x32xf32>
    %84 = arith.mulf %79, %83 : vector<2x32xf32>
    %85 = vector.broadcast %4 : vector<1x32xf32> to vector<2x32xf32>
    %86 = arith.mulf %84, %85 : vector<2x32xf32>
    %87 = vector.broadcast %5 : vector<1x32xf32> to vector<2x32xf32>
    %88 = arith.addf %86, %87 : vector<2x32xf32>
    %c0_29 = arith.constant 0 : index
    %c128 = arith.constant 128 : index
    %89 = vector.load %arg2[%c0_29, %c128] : memref<32x288xf32, #tpu.memory_space<vmem>>, vector<32x128xf32>
    %cst_30 = arith.constant dense<0.000000e+00> : vector<2x128xf32>
    %90 = tpu.matmul %88, %89, %cst_30 {dimension_numbers = #tpu.dot_dimension_numbers<[1], [0], [0], [1], [0, 0, 1, 1], [], []>} : vector<2x32xf32>, vector<32x128xf32>, vector<2x128xf32> -> vector<2x128xf32>
    %91 = vector.broadcast %7 : vector<1x128xf32> to vector<2x128xf32>
    %92 = arith.addf %90, %91 : vector<2x128xf32>
    %cst_31 = arith.constant 5.000000e-01 : f32
    %93 = vector.broadcast %cst_31 : f32 to vector<2x128xf32>
    %94 = arith.mulf %93, %92 : vector<2x128xf32>
    %cst_32 = arith.constant 0.707106769 : f32
    %95 = vector.broadcast %cst_32 : f32 to vector<2x128xf32>
    %96 = arith.mulf %92, %95 : vector<2x128xf32>
    %97 = math.erf %96 : vector<2x128xf32>
    %cst_33 = arith.constant 1.000000e+00 : f32
    %98 = vector.broadcast %cst_33 : f32 to vector<2x128xf32>
    %99 = arith.addf %98, %97 : vector<2x128xf32>
    %100 = arith.mulf %94, %99 : vector<2x128xf32>
    %c0_34 = arith.constant 0 : index
    %c0_35 = arith.constant 0 : index
    %101 = vector.load %arg3[%c0_34, %c0_35] : memref<128x32xf32, #tpu.memory_space<vmem>>, vector<128x32xf32>
    %cst_36 = arith.constant dense<0.000000e+00> : vector<2x32xf32>
    %102 = tpu.matmul %100, %101, %cst_36 {dimension_numbers = #tpu.dot_dimension_numbers<[1], [0], [0], [1], [0, 0, 1, 1], [], []>} : vector<2x128xf32>, vector<128x32xf32>, vector<2x32xf32> -> vector<2x32xf32>
    %103 = vector.broadcast %6 : vector<1x32xf32> to vector<2x32xf32>
    %104 = arith.addf %102, %103 : vector<2x32xf32>
    %105 = arith.addf %66, %104 : vector<2x32xf32>
    %106 = vector.extract_strided_slice %105 {offsets = [0, 0], sizes = [1, 32], strides = [1, 1]} : vector<2x32xf32> to vector<1x32xf32>
    %107 = vector.extract_strided_slice %105 {offsets = [1, 0], sizes = [1, 32], strides = [1, 1]} : vector<2x32xf32> to vector<1x32xf32>
    %108 = tpu.concatenate %106, %107 in 1 : vector<1x32xf32>, vector<1x32xf32> -> vector<1x64xf32>
    %c0_37 = arith.constant 0 : index
    %c0_38 = arith.constant 0 : index
    %109 = vector.load %arg5[%c0_37, %c0_38] : memref<1x64xf32, #tpu.memory_space<vmem>>, vector<1x64xf32>
    tpu.vector_store %arg5[%c0_37, %c0_38], %108 {strides = array<i32>} : memref<1x64xf32, #tpu.memory_space<vmem>>, vector<1x64xf32>,
    return
  }
  func.func @transform_0(%arg0: i32) -> (i32, i32, i32) {
    %c0_i32 = arith.constant 0 : i32
    %c0_i32_0 = arith.constant 0 : i32
    %c0_i32_1 = arith.constant 0 : i32
    %c0_i32_2 = arith.constant 0 : i32
    return %c0_i32, %c0_i32_0, %c0_i32_1 : i32, i32, i32
  }
  func.func @transform_1(%arg0: i32) -> (i32, i32) {
    %c0_i32 = arith.constant 0 : i32
    %c0_i32_0 = arith.constant 0 : i32
    %c0_i32_1 = arith.constant 0 : i32
    return %c0_i32, %c0_i32_0 : i32, i32
  }
  func.func @transform_2(%arg0: i32) -> (i32, i32) {
    %c0_i32 = arith.constant 0 : i32
    %c0_i32_0 = arith.constant 0 : i32
    %c0_i32_1 = arith.constant 0 : i32
    return %c0_i32, %c0_i32_0 : i32, i32
  }
  func.func @transform_3(%arg0: i32) -> (i32, i32) {
    %c0_i32 = arith.constant 0 : i32
    %c0_i32_0 = arith.constant 0 : i32
    %c0_i32_1 = arith.constant 0 : i32
    return %c0_i32, %c0_i32_0 : i32, i32
  }
  func.func @transform_4(%arg0: i32) -> (i32, i32) {
    %c0_i32 = arith.constant 0 : i32
    %c0_i32_0 = arith.constant 0 : i32
    %c0_i32_1 = arith.constant 0 : i32
    return %c0_i32, %c0_i32_0 : i32, i32
  }
}

</mosaic_0001>

<llo_original>
// kernel: cross_attention_block.1
$region0: #{cross_attention_block.1}
  #allocation0 [shape = 'u32[]', space=smem, size = 0x4, offset = 0x4, fixed_abs, tag = 'smem constant byte address 0x4 - core index']
  #allocation1 [shape = 'u32[72,128]{1,0:T(1,128)}', space=vmem, size = 0x9000, scoped, tag = 'internal scratch']
  %s0 = inlined_call_operand.vmem [shape: f32[2,8,32], index: 0, kind: input, shape index: {}]
  %s1 = inlined_call_operand.vmem [shape: f32[32,288], index: 1, kind: input, shape index: {}]
  %s2 = inlined_call_operand.vmem [shape: f32[128,32], index: 2, kind: input, shape index: {}]
  %s3 = inlined_call_operand.vmem [shape: f32[8,128], index: 3, kind: input, shape index: {}]
  %s4 = inlined_call_operand.vmem [shape: f32[1,64], index: 4, kind: output, shape index: {}]
  %s5 = sld [smem:[#allocation0]]
  $region26: #{cross_attention_block.1} parent=0
    _
  %s7 = ssub.s32 1, %s5
  %s8 = scalar_select 0, %s7, %s5
  // Predicated region
  $region2: #{cross_attention_block.1} parent=0 // pred_check
    _
  $region3: #{cross_attention_block.1} parent=0 // pred_check_branch
    %10 = sbr.rel (0) target = $region5
  $region4: #{cross_attention_block.1} parent=0 // pred_region
    _
  $region5: #{cross_attention_block.1} parent=0 // pred_fallthru
    _
  // Predicated region
  $region6: #{cross_attention_block.1} parent=0 // pred_check
    _
  $region7: #{cross_attention_block.1} parent=0 // pred_check_branch
    %12 = sbr.rel (0) target = $region9
  $region8: #{cross_attention_block.1} parent=0 // pred_region
    _
  $region9: #{cross_attention_block.1} parent=0 // pred_fallthru
    _
  // Predicated region
  $region10: #{cross_attention_block.1} parent=0 // pred_check
    _
  $region11: #{cross_attention_block.1} parent=0 // pred_check_branch
    %14 = sbr.rel (0) target = $region13
  $region12: #{cross_attention_block.1} parent=0 // pred_region
    _
  $region13: #{cross_attention_block.1} parent=0 // pred_fallthru
    _
  // Predicated region
  $region14: #{cross_attention_block.1} parent=0 // pred_check
    _
  $region15: #{cross_attention_block.1} parent=0 // pred_check_branch
    %16 = sbr.rel (0) target = $region17
  $region16: #{cross_attention_block.1} parent=0 // pred_region
    _
  $region17: #{cross_attention_block.1} parent=0 // pred_fallthru
    _
  %v17 = vld [vmem:[%s0] sm:$0xff]
  %v18 = vld [vmem:[%s0 + $0x8] sm:$0xff]
  %v19 = vld [vmem:[%s3] sm:$0x1]
  %v20 = vld [vmem:[%s3 + $0x1] sm:$0x1]
  %v21 = vld [vmem:[%s3 + $0x2] sm:$0x1]
  %v22 = vld [vmem:[%s3 + $0x3] sm:$0x1]
  %v23 = vld [vmem:[%s3 + $0x4] sm:$0x1]
  %v24 = vld [vmem:[%s3 + $0x5] sm:$0x1]
  %v25 = vld [vmem:[%s3 + $0x6] sm:$0x1]
  %vm26 = vcmask 261120
  %v27 = vsel %vm26, %v17, 0.0
  %28 = vadd.xlane.f32.xlu0 %v27
  %v29 = vpop.xlane.xlu0 %28
  %v30 = vsel %vm26, %v18, 0.0
  %31 = vadd.xlane.f32.xlu0 %v30
  %v32 = vpop.xlane.xlu0 %31
  %v33 = vrcp.pop 32.0
  %v34 = vmul.f32 32.0, %v33
  %v35 = vsub.f32 1.0, %v34
  %v36 = vmul.f32 %v33, %v35
  %v37 = vadd.f32 %v33, %v36
  %vm38 = vweird.f32 %v33
  %v39 = vsel %vm38, %v33, %v37
  %v40 = vmul.f32 %v29, %v39
  %v41 = vmul.f32 %v32, %v39
  %v42 = vsub.f32 %v17, %v40
  %v43 = vsub.f32 %v18, %v41
  %v44 = vmul.f32 %v42, %v42
  %v45 = vmul.f32 %v43, %v43
  %v46 = vsel %vm26, %v44, 0.0
  %47 = vadd.xlane.f32.xlu0 %v46
  %v48 = vpop.xlane.xlu0 %47
  %v49 = vsel %vm26, %v45, 0.0
  %50 = vadd.xlane.f32.xlu0 %v49
  %v51 = vpop.xlane.xlu0 %50
  %v52 = vmul.f32 %v48, %v39
  %v53 = vmul.f32 %v51, %v39
  %v54 = vadd.f32 %v52, 1e-05
  %v55 = vadd.f32 %v53, 1e-05
  %v56 = vrsqrt.pop %v54
  %v57 = vmul.f32 %v56, %v54
  %v58 = vmul.f32 %v57, %v56
  %v59 = vmul.f32 0.5, %v58
  %v60 = vsub.f32 1.5, %v59
  %v61 = vmul.f32 %v56, %v60
  %vm62 = vweird.f32 %v54
  %vm63 = vweird.f32 %v56
  %vm64 = vmor %vm62, %vm63
  %v65 = vsel %vm64, %v56, %v61
  %v66 = vrsqrt.pop %v55
  %v67 = vmul.f32 %v66, %v55
  %v68 = vmul.f32 %v67, %v66
  %v69 = vmul.f32 0.5, %v68
  %v70 = vsub.f32 1.5, %v69
  %v71 = vmul.f32 %v66, %v70
  %vm72 = vweird.f32 %v55
  %vm73 = vweird.f32 %v66
  %vm74 = vmor %vm72, %vm73
  %v75 = vsel %vm74, %v66, %v71
  %v76 = vmul.f32 %v42, %v65
  %v77 = vmul.f32 %v43, %v75
  %v78 = vperm.slane %v19, 0
  %v79 = vmul.f32 %v76, %v78
  %v80 = vmul.f32 %v77, %v78
  %v81 = vperm.slane %v20, 0
  %v82 = vadd.f32 %v79, %v81
  %v83 = vadd.f32 %v80, %v81
  %v84 = vld [vmem:[%s1] sm:$0xff]
  %v85 = vld [vmem:[%s1 + $0x18] sm:$0xff]
  %v86 = vld [vmem:[%s1 + $0x30] sm:$0xff]
  %v87 = vld [vmem:[%s1 + $0x48] sm:$0xff]
  %v89 = vsel %vm26, %v82, 0
  %v92 = vsel %vm26, %v83, 0
  %94 = vmatpush.msra.mxu0 0.0
  %95 = vmatpush.msra.mxu0 0.0
  %96 = vmatpush.msra.mxu0 0.0
  %97 = vmatpush.msra.mxu0 0.0
  %98 = vmatpush.msra.mxu0 0.0
  %99 = vmatpush.msra.mxu0 0.0
  %100 = vmatpush.msra.mxu0 0.0
  %101 = vmatpush.msra.mxu0 0.0
  %102 = vmatpush.msra.mxu0 0.0
  %103 = vmatpush.msra.mxu0 0.0
  %104 = vmatpush.msra.mxu0 0.0
  %105 = vmatpush.msra.mxu0 0.0
  %106 = vmatpush.msra.mxu0 %v87
  %107 = vmatpush.msra.mxu0 %v86
  %108 = vmatpush.msra.mxu0 %v85
  %109 = vmatpush.msra.mxu0 %v84
  %110 = vmatmul.f32.gmra.mxu0 %v89
  %v111 = vpop.f32.mrf.mxu0
  %v112 = vadd.f32 0.0, %v111
  %113 = vmatmul.f32.gmra.mxu0 %v92
  %v114 = vpop.f32.mrf.mxu0
  %v115 = vadd.f32 0.0, %v114
  %116 = vdwg.mxu0
  %v117 = vperm.slane %v112, 0
  %v118 = vperm.slane %v115, 0
  %121 = vrot.lane.b32.xlu0 %v112, 96
  %v122 = vpop.permute.xlu0 %121
  %123 = vrot.lane.b32.xlu0 %v115, 96
  %v124 = vpop.permute.xlu0 %123
  %v127 = vmul.f32 %v117, %v122
  %v128 = vmul.f32 %v118, %v124
  %v129 = vld [vmem:[%s1 + $0x10] sm:$0xff]
  %v130 = vld [vmem:[%s1 + $0x28] sm:$0xff]
  %v131 = vld [vmem:[%s1 + $0x40] sm:$0xff]
  %v132 = vld [vmem:[%s1 + $0x58] sm:$0xff]
  %v134 = vsel %vm26, %v127, 0
  %v137 = vsel %vm26, %v128, 0
  %139 = vmatpush.msra.mxu0 0.0
  %140 = vmatpush.msra.mxu0 0.0
  %141 = vmatpush.msra.mxu0 0.0
  %142 = vmatpush.msra.mxu0 0.0
  %143 = vmatpush.msra.mxu0 0.0
  %144 = vmatpush.msra.mxu0 0.0
  %145 = vmatpush.msra.mxu0 0.0
  %146 = vmatpush.msra.mxu0 0.0
  %147 = vmatpush.msra.mxu0 0.0
  %148 = vmatpush.msra.mxu0 0.0
  %149 = vmatpush.msra.mxu0 0.0
  %150 = vmatpush.msra.mxu0 0.0
  %151 = vmatpush.msra.mxu0 %v132
  %152 = vmatpush.msra.mxu0 %v131
  %153 = vmatpush.msra.mxu0 %v130
  %154 = vmatpush.msra.mxu0 %v129
  %155 = vmatmul.f32.gmra.mxu0 %v134
  %v156 = vpop.f32.mrf.mxu0
  %v157 = vadd.f32 0.0, %v156
  %158 = vmatmul.f32.gmra.mxu0 %v137
  %v159 = vpop.f32.mrf.mxu0
  %v160 = vadd.f32 0.0, %v159
  %161 = vdwg.mxu0
  %v162 = vsel %vm26, %v157, -inf
  %v163 = vrot.slane %v162, 4
  %v164 = vmax.f32 %v162, %v163
  %v165 = vrot.slane %v164, 2
  %v166 = vmax.f32 %v164, %v165
  %v167 = vrot.slane %v166, 1
  %v168 = vmax.f32 %v166, %v167
  %v169 = vsel %vm26, %v160, -inf
  %v170 = vrot.slane %v169, 4
  %v171 = vmax.f32 %v169, %v170
  %v172 = vrot.slane %v171, 2
  %v173 = vmax.f32 %v171, %v172
  %v174 = vrot.slane %v173, 1
  %v175 = vmax.f32 %v173, %v174
  %v176 = vsub.f32 %v157, %v168
  %v177 = vsub.f32 %v160, %v175
  %v178 = vmul.f32 %v176, 1.442695
  %v179 = vpow.pop %v178
  %v180 = vmul.f32 %v177, 1.442695
  %v181 = vpow.pop %v180
  %v182 = vsel %vm26, %v179, 0.0
  %v183 = vrot.slane %v182, 4
  %v184 = vadd.f32 %v182, %v183
  %v185 = vrot.slane %v184, 2
  %v186 = vadd.f32 %v184, %v185
  %v187 = vrot.slane %v186, 1
  %v188 = vadd.f32 %v186, %v187
  %v189 = vsel %vm26, %v181, 0.0
  %v190 = vrot.slane %v189, 4
  %v191 = vadd.f32 %v189, %v190
  %v192 = vrot.slane %v191, 2
  %v193 = vadd.f32 %v191, %v192
  %v194 = vrot.slane %v193, 1
  %v195 = vadd.f32 %v193, %v194
  %v196 = vrcp.pop %v188
  %v197 = vrcp.pop %v195
  %v198 = vmul.f32 %v179, %v196
  %v199 = vmul.f32 %v181, %v197
  %200 = vrot.lane.b32.xlu0 %v112, 64
  %v201 = vpop.permute.xlu0 %200
  %202 = vrot.lane.b32.xlu0 %v115, 64
  %v203 = vpop.permute.xlu0 %202
  %v206 = vmul.f32 %v198, %v201
  %v207 = vmul.f32 %v199, %v203
  %v208 = vsel %vm26, %v206, 0.0
  %v209 = vrot.slane %v208, 4
  %v210 = vadd.f32 %v208, %v209
  %v211 = vrot.slane %v210, 2
  %v212 = vadd.f32 %v210, %v211
  %v213 = vrot.slane %v212, 1
  %v214 = vadd.f32 %v212, %v213
  %v215 = vsel %vm26, %v207, 0.0
  %v216 = vrot.slane %v215, 4
  %v217 = vadd.f32 %v215, %v216
  %v218 = vrot.slane %v217, 2
  %v219 = vadd.f32 %v217, %v218
  %v220 = vrot.slane %v219, 1
  %v221 = vadd.f32 %v219, %v220
  %v222 = vperm.slane %v21, 0
  %vm225 = vcmask 1041409
  %v226 = vsel %vm225, %v221, %v214
  %231 = vrot.lane.b32.xlu0 %v84, 32
  %v232 = vpop.permute.xlu0 %231
  %233 = vrot.lane.b32.xlu0 %v85, 32
  %v234 = vpop.permute.xlu0 %233
  %235 = vrot.lane.b32.xlu0 %v86, 32
  %v236 = vpop.permute.xlu0 %235
  %237 = vrot.lane.b32.xlu0 %v87, 32
  %v238 = vpop.permute.xlu0 %237
  %v243 = vsel %vm26, %v226, 0
  %245 = vmatpush.msra.mxu0 0.0
  %246 = vmatpush.msra.mxu0 0.0
  %247 = vmatpush.msra.mxu0 0.0
  %248 = vmatpush.msra.mxu0 0.0
  %249 = vmatpush.msra.mxu0 0.0
  %250 = vmatpush.msra.mxu0 0.0
  %251 = vmatpush.msra.mxu0 0.0
  %252 = vmatpush.msra.mxu0 0.0
  %253 = vmatpush.msra.mxu0 0.0
  %254 = vmatpush.msra.mxu0 0.0
  %255 = vmatpush.msra.mxu0 0.0
  %256 = vmatpush.msra.mxu0 0.0
  %257 = vmatpush.msra.mxu0 %v238
  %258 = vmatpush.msra.mxu0 %v236
  %259 = vmatpush.msra.mxu0 %v234
  %260 = vmatpush.msra.mxu0 %v232
  %261 = vmatmul.f32.gmra.mxu0 %v243
  %v262 = vpop.f32.mrf.mxu0
  %v263 = vadd.f32 %v222, %v262
  %264 = vdwg.mxu0
  %v266 = vrot.slane %v263, 1
  %v269 = vadd.f32 %v17, %v263
  %v270 = vadd.f32 %v18, %v266
  %v273 = vrot.slane %v270, 7
  %v274 = vsel %vm225, %v273, %v269
  %vm276 = vcmask 254976
  %v277 = vsel %vm276, %v274, 0.0
  %278 = vadd.xlane.f32.xlu0 %v277
  %v279 = vpop.xlane.xlu0 %278
  %v280 = vmul.f32 %v279, %v39
  %v282 = vrot.slane %v280, 1
  %v285 = vsub.f32 %v269, %v280
  %v286 = vsub.f32 %v270, %v282
  %v287 = vmul.f32 %v285, %v285
  %v288 = vmul.f32 %v286, %v286
  %v291 = vrot.slane %v288, 7
  %v292 = vsel %vm225, %v291, %v287
  %v294 = vsel %vm276, %v292, 0.0
  %295 = vadd.xlane.f32.xlu0 %v294
  %v296 = vpop.xlane.xlu0 %295
  %v297 = vmul.f32 %v296, %v39
  %v298 = vadd.f32 %v297, 1e-05
  %v299 = vrsqrt.pop %v298
  %v300 = vmul.f32 %v299, %v298
  %v301 = vmul.f32 %v300, %v299
  %v302 = vmul.f32 0.5, %v301
  %v303 = vsub.f32 1.5, %v302
  %v304 = vmul.f32 %v299, %v303
  %vm305 = vweird.f32 %v298
  %vm306 = vweird.f32 %v299
  %vm307 = vmor %vm305, %vm306
  %v308 = vsel %vm307, %v299, %v304
  %v310 = vrot.slane %v308, 1
  %v313 = vmul.f32 %v285, %v308
  %v314 = vmul.f32 %v286, %v310
  %v315 = vperm.slane %v22, 0
  %v316 = vmul.f32 %v313, %v315
  %v317 = vmul.f32 %v314, %v315
  %v318 = vperm.slane %v23, 0
  %v319 = vadd.f32 %v316, %v318
  %v320 = vadd.f32 %v317, %v318
  %v321 = vld [vmem:[%s1 + $0x8] sm:$0xff]
  %v322 = vld [vmem:[%s1 + $0x20] sm:$0xff]
  %v323 = vld [vmem:[%s1 + $0x38] sm:$0xff]
  %v324 = vld [vmem:[%s1 + $0x50] sm:$0xff]
  %v325 = vperm.slane %v25, 0
  %v328 = vrot.slane %v320, 7
  %v329 = vsel %vm225, %v328, %v319
  %v330 = vsel %vm26, %v329, 0
  %332 = vmatpush.msra.mxu0 0.0
  %333 = vmatpush.msra.mxu0 0.0
  %334 = vmatpush.msra.mxu0 0.0
  %335 = vmatpush.msra.mxu0 0.0
  %336 = vmatpush.msra.mxu0 0.0
  %337 = vmatpush.msra.mxu0 0.0
  %338 = vmatpush.msra.mxu0 0.0
  %339 = vmatpush.msra.mxu0 0.0
  %340 = vmatpush.msra.mxu0 0.0
  %341 = vmatpush.msra.mxu0 0.0
  %342 = vmatpush.msra.mxu0 0.0
  %343 = vmatpush.msra.mxu0 0.0
  %344 = vmatpush.msra.mxu0 %v324
  %345 = vmatpush.msra.mxu0 %v323
  %346 = vmatpush.msra.mxu0 %v322
  %347 = vmatpush.msra.mxu0 %v321
  %348 = vmatmul.f32.gmra.mxu0 %v330
  %v349 = vpop.f32.mrf.mxu0
  %v350 = vadd.f32 %v325, %v349
  %351 = vdwg.mxu0
  %v352 = vmul.f32 %v350, 0.5
  %v353 = vmul.f32 %v350, 0.70710677
  %v354 = vmul.f32 %v353, %v353
  %v355 = vmin.f32 16.0, %v354
  %v356 = vmul.f32 %v355, 2.1237322e-06
  %v357 = vadd.f32 %v356, 0.00028619796
  %v358 = vmul.f32 %v355, %v357
  %v359 = vadd.f32 %v358, 0.0036580483
  %v360 = vmul.f32 %v355, %v359
  %v361 = vadd.f32 %v360, 0.05243302
  %v362 = vmul.f32 %v355, %v361
  %v363 = vadd.f32 %v362, 0.18741608
  %v364 = vmul.f32 %v355, %v363
  %v365 = vadd.f32 %v364, 1.1283791
  %v366 = vmul.f32 %v353, %v365
  %v367 = vmul.f32 %v355, 3.8918573e-05
  %v368 = vadd.f32 %v367, 0.001143296
  %v369 = vmul.f32 %v355, %v368
  %v370 = vadd.f32 %v369, 0.014752088
  %v371 = vmul.f32 %v355, %v370
  %v372 = vadd.f32 %v371, 0.112945676
  %v373 = vmul.f32 %v355, %v372
  %v374 = vadd.f32 %v373, 0.4994258
  %v375 = vmul.f32 %v355, %v374
  %v376 = vadd.f32 %v375, 1.0
  %v377 = vrcp.pop %v376
  %v378 = vmul.f32 %v376, %v377
  %v379 = vsub.f32 1.0, %v378
  %v380 = vmul.f32 %v377, %v379
  %v381 = vadd.f32 %v377, %v380
  %vm382 = vweird.f32 %v376
  %vm383 = vweird.f32 %v377
  %vm384 = vmor %vm382, %vm383
  %v385 = vsel %vm384, %v377, %v381
  %v386 = vand.u32 2147483647, %v376
  %vm387 = vcmp.eq.f32.partialorder %v386, 8.507059e+37
  %v388 = vand.u32 %v376, 2147483648
  %v389 = vor.u32 1.1754944e-38, %v388
  %v390 = vsel %vm387, %v389, %v385
  %v391 = vmul.f32 %v366, %v390
  %v392 = vmin.f32 %v391, 1.0
  %v393 = vmax.f32 %v392, -1.0
  %v394 = vadd.f32 %v393, 1.0
  %v395 = vmul.f32 %v352, %v394
  %v396 = vld [vmem:[%s2] sm:$0xff]
  %v397 = vld [vmem:[%s2 + $0x8] sm:$0xff]
  %v398 = vld [vmem:[%s2 + $0x10] sm:$0xff]
  %v399 = vld [vmem:[%s2 + $0x18] sm:$0xff]
  %v400 = vld [vmem:[%s2 + $0x20] sm:$0xff]
  %v401 = vld [vmem:[%s2 + $0x28] sm:$0xff]
  %v402 = vld [vmem:[%s2 + $0x30] sm:$0xff]
  %v403 = vld [vmem:[%s2 + $0x38] sm:$0xff]
  %v404 = vld [vmem:[%s2 + $0x40] sm:$0xff]
  %v405 = vld [vmem:[%s2 + $0x48] sm:$0xff]
  %v406 = vld [vmem:[%s2 + $0x50] sm:$0xff]
  %v407 = vld [vmem:[%s2 + $0x58] sm:$0xff]
  %v408 = vld [vmem:[%s2 + $0x60] sm:$0xff]
  %v409 = vld [vmem:[%s2 + $0x68] sm:$0xff]
  %v410 = vld [vmem:[%s2 + $0x70] sm:$0xff]
  %v411 = vld [vmem:[%s2 + $0x78] sm:$0xff]
  %v412 = vperm.slane %v24, 0
  %413 = vmatpush.msra.mxu0 %v411
  %414 = vmatpush.msra.mxu0 %v410
  %415 = vmatpush.msra.mxu0 %v409
  %416 = vmatpush.msra.mxu0 %v408
  %417 = vmatpush.msra.mxu0 %v407
  %418 = vmatpush.msra.mxu0 %v406
  %419 = vmatpush.msra.mxu0 %v405
  %420 = vmatpush.msra.mxu0 %v404
  %421 = vmatpush.msra.mxu0 %v403
  %422 = vmatpush.msra.mxu0 %v402
  %423 = vmatpush.msra.mxu0 %v401
  %424 = vmatpush.msra.mxu0 %v400
  %425 = vmatpush.msra.mxu0 %v399
  %426 = vmatpush.msra.mxu0 %v398
  %427 = vmatpush.msra.mxu0 %v397
  %428 = vmatpush.msra.mxu0 %v396
  %429 = vmatmul.f32.gmra.mxu0 %v395
  %v430 = vpop.f32.mrf.mxu0
  %v431 = vadd.f32 %v412, %v430
  %432 = vdwg.mxu0
  %v434 = vrot.slane %v431, 1
  %v437 = vadd.f32 %v269, %v431
  %v438 = vadd.f32 %v270, %v434
  %440 = vrot.lane.b32.xlu0 %v438, 32
  %v441 = vpop.permute.xlu0 %440
  %v443 = vsel %vm26, %v437, %v441
  %vm444 = vcmask 516096
  %445 = vst.msk [vmem:[%s4] sm:$0x1] %vm444, %v443
  // Predicated region
  $region18: #{cross_attention_block.1} parent=0 // pred_check
    _
  $region19: #{cross_attention_block.1} parent=0 // pred_check_branch
    %447 = sbr.rel (0) target = $region21
  $region20: #{cross_attention_block.1} parent=0 // pred_region
    _
  $region21: #{cross_attention_block.1} parent=0 // pred_fallthru
    _
  // Predicated region
  $region22: #{cross_attention_block.1} parent=0 // pred_check
    _
  $region23: #{cross_attention_block.1} parent=0 // pred_check_branch
    %449 = sbr.rel (0) target = $region25
  $region24: #{cross_attention_block.1} parent=0 // pred_region
    _
  $region25: #{cross_attention_block.1} parent=0 // pred_fallthru
    _

</llo_original>
